<compile_context>
chip_gen: v7x
topology: tpu7x:2x2x1
jax: 0.10.0
libtpu: 0.0.40
codegen_flags: <defaults>
</compile_context>

<pallas_src>
import jax
import jax.numpy as jnp
from jax.experimental import pallas as pl
from jax.experimental.pallas import tpu as pltpu

EPS = 1e-5


# --------------------------------------------------------------------------- #
# Tile / VMEM helpers
# --------------------------------------------------------------------------- #
def _pick_tile(dim, preferred, align):
    """Largest multiple of `align` that divides `dim` and is <= `preferred`.
    Falls back to the full dimension (always a legal block shape)."""
    if dim <= preferred:
        return dim
    t = (preferred // align) * align
    while t >= align:
        if dim % t == 0:
            return t
        t -= align
    return dim


def _vmem_budget_bytes():
    """Per-generation VMEM budget, leaving headroom for compiler-internal scratch
    and double buffers (~48 MiB on v7x, ~96 MiB on v5e/v6e)."""
    try:
        cap = int(pltpu.get_tpu_info().vmem_capacity_bytes)
    except Exception:
        cap = 64 << 20  # conservative default (v7x physical VMEM)
    return int(cap * 3 // 4)


# --------------------------------------------------------------------------- #
# Fused path: whole batch resident in VMEM (small / medium N)
# --------------------------------------------------------------------------- #
def _fused_kernel(x_ref, w_ref, gamma_ref, beta_ref, o_ref):
    """Grid = (D tiles, K tiles).  K (reduction) is last; the (N, tn) output block is
    constant across K, stays VMEM-resident, and serves as the matmul accumulator."""
    k = pl.program_id(1)

    @pl.when(k == 0)
    def _():
        o_ref[...] = jnp.zeros_like(o_ref)

    # MXU accumulation straight into the resident output block (f32).
    o_ref[...] += jnp.dot(x_ref[...], w_ref[...], preferred_element_type=jnp.float32)

    @pl.when(k == pl.num_programs(1) - 1)
    def _():
        y = o_ref[...]                                   # (N, tn), f32
        inv_n = jnp.float32(1.0 / y.shape[0])
        mean = jnp.sum(y, axis=0, keepdims=True) * inv_n
        centered = y - mean
        # Two-pass variance over the resident block: numerically robust, negligible cost.
        var = jnp.sum(centered * centered, axis=0, keepdims=True) * inv_n
        scale = gamma_ref[...] * jax.lax.rsqrt(var + EPS)
        o_ref[...] = jnp.maximum(centered * scale + beta_ref[...], 0.0).astype(o_ref.dtype)


def _gnn_block_fused(x, w, gamma2, beta2, *, tn, tk, vmem_limit):
    N, K = x.shape
    D = w.shape[1]
    isz = x.dtype.itemsize

    flops = 2 * N * K * D + 8 * N * D
    bytes_accessed = (N * K * isz) * (D // tn) + K * D * isz + N * D * 4 + 2 * D * 4

    return pl.pallas_call(
        _fused_kernel,
        out_shape=jax.ShapeDtypeStruct((N, D), jnp.float32),
        grid_spec=pltpu.PrefetchScalarGridSpec(
            num_scalar_prefetch=0,
            grid=(D // tn, K // tk),                          # (parallel D, reduction K last)
            in_specs=[
                pl.BlockSpec((N, tk), lambda j, k: (0, k)),   # x tile
                pl.BlockSpec((tk, tn), lambda j, k: (k, j)),  # W tile
                pl.BlockSpec((1, tn), lambda j, k: (0, j)),   # gamma
                pl.BlockSpec((1, tn), lambda j, k: (0, j)),   # beta
            ],
            out_specs=pl.BlockSpec((N, tn), lambda j, k: (0, j)),
        ),
        compiler_params=pltpu.CompilerParams(
            dimension_semantics=("parallel", "arbitrary"),
            vmem_limit_bytes=int(vmem_limit),
        ),
        cost_estimate=pl.CostEstimate(
            flops=int(flops), transcendentals=int(D), bytes_accessed=int(bytes_accessed)
        ),
    )(x, w, gamma2, beta2)


# --------------------------------------------------------------------------- #
# Tiled path: N tiled, two-pass batch-norm (large N / v7x 64 MiB VMEM)
# --------------------------------------------------------------------------- #
def _matmul_stats_kernel(x_ref, w_ref, y_ref, sum_ref, sq_ref):
    """Grid = (D tiles [parallel], N tiles, K tiles [reduction, last]).
    y block (tm, tn) accumulates the matmul across K; per-feature sum / sum-of-squares
    blocks (1, tn) are constant across N and K so they stay resident per D tile."""
    i = pl.program_id(1)
    k = pl.program_id(2)

    @pl.when(k == 0)
    def _():
        y_ref[...] = jnp.zeros_like(y_ref)

    @pl.when(jnp.logical_and(i == 0, k == 0))
    def _():
        sum_ref[...] = jnp.zeros_like(sum_ref)
        sq_ref[...] = jnp.zeros_like(sq_ref)

    y_ref[...] += jnp.dot(x_ref[...], w_ref[...], preferred_element_type=jnp.float32)

    @pl.when(k == pl.num_programs(2) - 1)
    def _():
        y = y_ref[...]
        sum_ref[...] += jnp.sum(y, axis=0, keepdims=True)
        sq_ref[...] += jnp.sum(y * y, axis=0, keepdims=True)


def _make_bn_act_kernel(n_rows):
    inv_n = float(1.0 / n_rows)

    def bn_act_kernel(y_ref, sum_ref, sq_ref, gamma_ref, beta_ref, o_ref):
        mean = sum_ref[...] * inv_n
        # One-pass variance across N tiles; clamp to avoid rsqrt of a small negative.
        var = jnp.maximum(sq_ref[...] * inv_n - mean * mean, 0.0)
        scale = gamma_ref[...] * jax.lax.rsqrt(var + EPS)
        shift = beta_ref[...] - mean * scale
        o_ref[...] = jnp.maximum(y_ref[...] * scale + shift, 0.0).astype(o_ref.dtype)

    return bn_act_kernel


def _gnn_block_tiled(x, w, gamma2, beta2, *, tm, tn, tk, vmem_limit):
    N, K = x.shape
    D = w.shape[1]
    isz = x.dtype.itemsize

    mm_flops = 2 * N * K * D
    mm_bytes = (N * K * isz) * (D // tn) + K * D * isz + N * D * 4 + 2 * D * 4

    y, s, ss = pl.pallas_call(
        _matmul_stats_kernel,
        out_shape=(
            jax.ShapeDtypeStruct((N, D), jnp.float32),   # pre-BN activations
            jax.ShapeDtypeStruct((1, D), jnp.float32),   # per-feature sum
            jax.ShapeDtypeStruct((1, D), jnp.float32),   # per-feature sum of squares
        ),
        grid_spec=pltpu.PrefetchScalarGridSpec(
            num_scalar_prefetch=0,
            grid=(D // tn, N // tm, K // tk),
            in_specs=[
                pl.BlockSpec((tm, tk), lambda j, i, k: (i, k)),   # x tile
                pl.BlockSpec((tk, tn), lambda j, i, k: (k, j)),   # W tile
            ],
            out_specs=[
                pl.BlockSpec((tm, tn), lambda j, i, k: (i, j)),   # y tile
                pl.BlockSpec((1, tn), lambda j, i, k: (0, j)),    # sum (resident per j)
                pl.BlockSpec((1, tn), lambda j, i, k: (0, j)),    # sumsq (resident per j)
            ],
        ),
        compiler_params=pltpu.CompilerParams(
            dimension_semantics=("parallel", "arbitrary", "arbitrary"),
            vmem_limit_bytes=int(vmem_limit),
        ),
        cost_estimate=pl.CostEstimate(
            flops=int(mm_flops), transcendentals=0, bytes_accessed=int(mm_bytes)
        ),
    )(x, w)

    bn_flops = 4 * N * D
    bn_bytes = 2 * N * D * 4 + 4 * D * 4

    return pl.pallas_call(
        _make_bn_act_kernel(N),
        out_shape=jax.ShapeDtypeStruct((N, D), jnp.float32),
        grid_spec=pltpu.PrefetchScalarGridSpec(
            num_scalar_prefetch=0,
            grid=(N // tm, D // tn),
            in_specs=[
                pl.BlockSpec((tm, tn), lambda i, j: (i, j)),
                pl.BlockSpec((1, tn), lambda i, j: (0, j)),
                pl.BlockSpec((1, tn), lambda i, j: (0, j)),
                pl.BlockSpec((1, tn), lambda i, j: (0, j)),
                pl.BlockSpec((1, tn), lambda i, j: (0, j)),
            ],
            out_specs=pl.BlockSpec((tm, tn), lambda i, j: (i, j)),
        ),
        compiler_params=pltpu.CompilerParams(
            dimension_semantics=("parallel", "parallel"),
            vmem_limit_bytes=int(vmem_limit),
        ),
        cost_estimate=pl.CostEstimate(
            flops=int(bn_flops), transcendentals=int(D), bytes_accessed=int(bn_bytes)
        ),
    )(y, s, ss, gamma2, beta2)


# --------------------------------------------------------------------------- #
# Public wrapper
# --------------------------------------------------------------------------- #
def gnn_block(x, w, gamma, beta, *, compute_dtype=None, tm=None, tn=None, tk=None,
              force_tiled=False):
    """relu(batchnorm(x @ W)).  The Linear bias is intentionally omitted: it cancels
    exactly under training-mode BatchNorm.  Set compute_dtype=jnp.bfloat16 to run the
    matmul at bf16 MXU rate (accumulation stays f32)."""
    N, K = x.shape
    Kw, D = w.shape
    assert Kw == K

    if compute_dtype is not None:
        x = x.astype(compute_dtype)
        w = w.astype(compute_dtype)

    # Feature tile: prefer >=256 (fills the 2x256x256 MXU on v6e/v7x, shrinks x re-reads).
    if tn is None:
        tn = _pick_tile(D, 512, 128)
    # Reduction tile: fat K steps (multiples of 256) amortize per-step overhead.
    if tk is None:
        tk = _pick_tile(K, 512, 256)
    # Row tile for the N-tiled path.
    if tm is None:
        tm = _pick_tile(N, 512, 128)

    assert D % tn == 0 and K % tk == 0 and N % tm == 0, (N, K, D, tm, tk, tn)

    gamma2 = gamma.reshape(1, D).astype(jnp.float32)
    beta2 = beta.reshape(1, D).astype(jnp.float32)

    vmem_limit = _vmem_budget_bytes()

    # Fused-path footprint: double-buffered x/W tiles + (N, tn) f32 output block (x2).
    isz = x.dtype.itemsize
    fused_bytes = 2 * N * tk * isz + 2 * tk * tn * isz + 2 * N * tn * 4 + 4 * tn * 4

    if force_tiled or fused_bytes > vmem_limit:
        return _gnn_block_tiled(x, w, gamma2, beta2, tm=tm, tn=tn, tk=tk,
                                vmem_limit=vmem_limit)
    return _gnn_block_fused(x, w, gamma2, beta2, tn=tn, tk=tk, vmem_limit=vmem_limit)


# --------------------------------------------------------------------------- #
# Pure-JAX reference (keeps the Linear bias, which cancels under batch-norm)
# --------------------------------------------------------------------------- #
def gnn_block_ref(x, w, b, gamma, beta):
    y = x @ w + b
    mean = jnp.mean(y, axis=0, keepdims=True)
    var = jnp.mean((y - mean) ** 2, axis=0, keepdims=True)
    y_hat = (y - mean) * jax.lax.rsqrt(var + EPS)
    return jnp.maximum(gamma * y_hat + beta, 0.0)


if __name__ == "__main__":
    # Small shapes consistent with a GNN node-feature matrix: x is [N, in_dim].
    N, in_dim, out_dim = 128, 256, 128

    key = jax.random.PRNGKey(0)
    kx, kw, kb, kg, kbeta = jax.random.split(key, 5)

    x = jax.random.normal(kx, (N, in_dim), dtype=jnp.float32)
    w = jax.random.normal(kw, (in_dim, out_dim), dtype=jnp.float32) * (1.0 / jnp.sqrt(float(in_dim)))
    b = 0.1 * jax.random.normal(kb, (out_dim,), dtype=jnp.float32)   # cancels under batch-norm
    gamma = 1.0 + 0.1 * jax.random.normal(kg, (out_dim,), dtype=jnp.float32)
    beta = 0.1 * jax.random.normal(kbeta, (out_dim,), dtype=jnp.float32)

    ref = gnn_block_ref(x, w, b, gamma, beta)

    # Fused single-kernel path (batch fits in VMEM).
    out_fused = jax.block_until_ready(gnn_block(x, w, gamma, beta))
    assert out_fused.shape == (N, out_dim)
    err_f = float(jnp.max(jnp.abs(out_fused - ref)))
    assert jnp.allclose(out_fused, ref, atol=1e-4, rtol=1e-4), err_f

    # N-tiled two-pass path (selected automatically for large N / tight VMEM; forced here).
    out_tiled = jax.block_until_ready(gnn_block(x, w, gamma, beta, force_tiled=True, tm=64))
    err_t = float(jnp.max(jnp.abs(out_tiled - ref)))
    assert jnp.allclose(out_tiled, ref, atol=1e-4, rtol=1e-4), err_t

    print("KERNEL_OK")
</pallas_src>

<mosaic_0001>
module attributes {stable_mosaic.version = 11 : i64} {
  func.func @_fused_kernel(%arg0: i32, %arg1: i32, %arg2: memref<128x256xf32, #tpu.memory_space<vmem>>, %arg3: memref<256x128xf32, #tpu.memory_space<vmem>>, %arg4: memref<1x128xf32, #tpu.memory_space<vmem>>, %arg5: memref<1x128xf32, #tpu.memory_space<vmem>>, %arg6: memref<128x128xf32, #tpu.memory_space<vmem>>) attributes {dimension_semantics = [#tpu.dimension_semantics<parallel>, #tpu.dimension_semantics<arbitrary>], iteration_bounds = array<i64: 1, 1>, scalar_prefetch = 0 : i64, scratch_operands = 0 : i64, tpu.core_type = #tpu.core_type<tc>, window_params = [{transform_indices = @transform_0, window_bounds = array<i64: 128, 256>}, {transform_indices = @transform_1, window_bounds = array<i64: 256, 128>}, {transform_indices = @transform_2, window_bounds = array<i64: 1, 128>}, {transform_indices = @transform_3, window_bounds = array<i64: 1, 128>}, {transform_indices = @transform_4, window_bounds = array<i64: 128, 128>}]} {
    %c0_i32 = arith.constant 0 : i32
    %0 = arith.cmpi eq, %arg1, %c0_i32 : i32
    %1 = arith.extui %0 : i1 to i32
    %c0_i32_0 = arith.constant 0 : i32
    %2 = arith.cmpi ne, %1, %c0_i32_0 : i32
    scf.if %2 {
      %cst_10 = arith.constant 0.000000e+00 : f32
      %12 = vector.broadcast %cst_10 : f32 to vector<128x128xf32>
      %c0_11 = arith.constant 0 : index
      %c0_12 = arith.constant 0 : index
      %13 = vector.load %arg6[%c0_11, %c0_12] : memref<128x128xf32, #tpu.memory_space<vmem>>, vector<128x128xf32>
      tpu.vector_store %arg6[%c0_11, %c0_12], %12 {strides = array<i32>} : memref<128x128xf32, #tpu.memory_space<vmem>>, vector<128x128xf32>,
    } else {
    }
    %c0 = arith.constant 0 : index
    %c0_1 = arith.constant 0 : index
    %3 = vector.load %arg6[%c0, %c0_1] : memref<128x128xf32, #tpu.memory_space<vmem>>, vector<128x128xf32>
    %c0_2 = arith.constant 0 : index
    %c0_3 = arith.constant 0 : index
    %4 = vector.load %arg2[%c0_2, %c0_3] : memref<128x256xf32, #tpu.memory_space<vmem>>, vector<128x256xf32>
    %c0_4 = arith.constant 0 : index
    %c0_5 = arith.constant 0 : index
    %5 = vector.load %arg3[%c0_4, %c0_5] : memref<256x128xf32, #tpu.memory_space<vmem>>, vector<256x128xf32>
    %cst = arith.constant dense<0.000000e+00> : vector<128x128xf32>
    %6 = tpu.matmul %4, %5, %cst {dimension_numbers = #tpu.dot_dimension_numbers<[1], [0], [0], [1], [0, 0, 1, 1], [], []>} : vector<128x256xf32>, vector<256x128xf32>, vector<128x128xf32> -> vector<128x128xf32>
    %7 = arith.addf %3, %6 : vector<128x128xf32>
    %c0_6 = arith.constant 0 : index
    %c0_7 = arith.constant 0 : index
    %8 = vector.load %arg6[%c0_6, %c0_7] : memref<128x128xf32, #tpu.memory_space<vmem>>, vector<128x128xf32>
    tpu.vector_store %arg6[%c0_6, %c0_7], %7 {strides = array<i32>} : memref<128x128xf32, #tpu.memory_space<vmem>>, vector<128x128xf32>,
    %c0_i32_8 = arith.constant 0 : i32
    %9 = arith.cmpi eq, %arg1, %c0_i32_8 : i32
    %10 = arith.extui %9 : i1 to i32
    %c0_i32_9 = arith.constant 0 : i32
    %11 = arith.cmpi ne, %10, %c0_i32_9 : i32
    scf.if %11 {
      %c0_10 = arith.constant 0 : index
      %c0_11 = arith.constant 0 : index
      %12 = vector.load %arg6[%c0_10, %c0_11] : memref<128x128xf32, #tpu.memory_space<vmem>>, vector<128x128xf32>
      %cst_12 = arith.constant dense<0.000000e+00> : vector<128xf32>
      %13 = vector.multi_reduction <add>, %12, %cst_12 [0] : vector<128x128xf32> to vector<128xf32>
      %14 = vector.shape_cast %13 : vector<128xf32> to vector<1x128xf32>
      %cst_13 = arith.constant 7.812500e-03 : f32
      %15 = vector.broadcast %cst_13 : f32 to vector<1x128xf32>
      %16 = arith.mulf %14, %15 : vector<1x128xf32>
      %17 = vector.broadcast %16 : vector<1x128xf32> to vector<128x128xf32>
      %18 = arith.subf %12, %17 : vector<128x128xf32>
      %19 = arith.mulf %18, %18 : vector<128x128xf32>
      %cst_14 = arith.constant dense<0.000000e+00> : vector<128xf32>
      %20 = vector.multi_reduction <add>, %19, %cst_14 [0] : vector<128x128xf32> to vector<128xf32>
      %21 = vector.shape_cast %20 : vector<128xf32> to vector<1x128xf32>
      %cst_15 = arith.constant 7.812500e-03 : f32
      %22 = vector.broadcast %cst_15 : f32 to vector<1x128xf32>
      %23 = arith.mulf %21, %22 : vector<1x128xf32>
      %c0_16 = arith.constant 0 : index
      %c0_17 = arith.constant 0 : index
      %24 = vector.load %arg4[%c0_16, %c0_17] : memref<1x128xf32, #tpu.memory_space<vmem>>, vector<1x128xf32>
      %cst_18 = arith.constant 9.99999974E-6 : f32
      %25 = vector.broadcast %cst_18 : f32 to vector<1x128xf32>
      %26 = arith.addf %23, %25 : vector<1x128xf32>
      %27 = math.rsqrt %26 : vector<1x128xf32>
      %28 = arith.mulf %24, %27 : vector<1x128xf32>
      %29 = vector.broadcast %28 : vector<1x128xf32> to vector<128x128xf32>
      %30 = arith.mulf %18, %29 : vector<128x128xf32>
      %c0_19 = arith.constant 0 : index
      %c0_20 = arith.constant 0 : index
      %31 = vector.load %arg5[%c0_19, %c0_20] : memref<1x128xf32, #tpu.memory_space<vmem>>, vector<1x128xf32>
      %32 = vector.broadcast %31 : vector<1x128xf32> to vector<128x128xf32>
      %33 = arith.addf %30, %32 : vector<128x128xf32>
      %cst_21 = arith.constant 0.000000e+00 : f32
      %34 = vector.broadcast %cst_21 : f32 to vector<128x128xf32>
      %35 = arith.maximumf %33, %34 : vector<128x128xf32>
      %c0_22 = arith.constant 0 : index
      %c0_23 = arith.constant 0 : index
      %36 = vector.load %arg6[%c0_22, %c0_23] : memref<128x128xf32, #tpu.memory_space<vmem>>, vector<128x128xf32>
      tpu.vector_store %arg6[%c0_22, %c0_23], %35 {strides = array<i32>} : memref<128x128xf32, #tpu.memory_space<vmem>>, vector<128x128xf32>,
    } else {
    }
    return
  }
  func.func @transform_0(%arg0: i32, %arg1: i32) -> (i32, i32) {
    %c0_i32 = arith.constant 0 : i32
    %c0_i32_0 = arith.constant 0 : i32
    return %c0_i32, %arg1 : i32, i32
  }
  func.func @transform_1(%arg0: i32, %arg1: i32) -> (i32, i32) {
    %c0_i32 = arith.constant 0 : i32
    return %arg1, %arg0 : i32, i32
  }
  func.func @transform_2(%arg0: i32, %arg1: i32) -> (i32, i32) {
    %c0_i32 = arith.constant 0 : i32
    %c0_i32_0 = arith.constant 0 : i32
    return %c0_i32, %arg0 : i32, i32
  }
  func.func @transform_3(%arg0: i32, %arg1: i32) -> (i32, i32) {
    %c0_i32 = arith.constant 0 : i32
    %c0_i32_0 = arith.constant 0 : i32
    return %c0_i32, %arg0 : i32, i32
  }
  func.func @transform_4(%arg0: i32, %arg1: i32) -> (i32, i32) {
    %c0_i32 = arith.constant 0 : i32
    %c0_i32_0 = arith.constant 0 : i32
    return %c0_i32, %arg0 : i32, i32
  }
}

</mosaic_0001>

<llo_original>
// kernel: tpu_custom_call.1
$region0: #{tpu_custom_call.1}
  #allocation0 [shape = 'u32[]', space=smem, size = 0x4, offset = 0x4, fixed_abs, tag = 'smem constant byte address 0x4 - core index']
  #allocation1 [shape = 'u32[144,128]{1,0:T(1,128)}', space=vmem, size = 0x12000, scoped, tag = 'internal scratch']
  %s0 = inlined_call_operand.hbm [shape: f32[128,256], index: 0, kind: input, shape index: {}]
  %s1 = inlined_call_operand.hbm [shape: f32[256,128], index: 1, kind: input, shape index: {}]
  %s2 = inlined_call_operand.vmem [shape: f32[1,128], index: 2, kind: input, shape index: {}]
  %s3 = inlined_call_operand.vmem [shape: f32[1,128], index: 3, kind: input, shape index: {}]
  %s4 = inlined_call_operand.hbm [shape: f32[128,128], index: 4, kind: output, shape index: {}]
  %s5 = sld [smem:[#allocation0]]
  $region42: #{tpu_custom_call.1} parent=0
    _
  %s7 = ssub.s32 1, %s5
  %s8 = scalar_select 0, %s7, %s5
  $region1: #{tpu_custom_call.1} parent=0
    #allocation2 [shape = 'u8[131072]{0}', space=vmem, size = 0x20000, scoped, tag = 'input window, operand 0, single buffered']
    #allocation3 [shape = 's32[1]{0}', space=sflag, size = 0x4, scoped, tag = 'scoped memory for tpu_custom_call.1']
    #allocation4 [shape = 's32[1]{0}', space=sflag, size = 0x4, scoped, tag = 'scoped memory for tpu_custom_call.1']
    #allocation5 [shape = 'u8[131072]{0}', space=vmem, size = 0x20000, scoped, tag = 'input window, operand 1, single buffered']
    #allocation6 [shape = 's32[1]{0}', space=sflag, size = 0x4, scoped, tag = 'scoped memory for tpu_custom_call.1']
    #allocation7 [shape = 'u8[65536]{0}', space=vmem, size = 0x10000, scoped, tag = 'output window, operand 0, single buffered']
    %9 = vsyncpa [#allocation3], 0
    %10 = vsyncpa [#allocation6], 0
    %11 = vsyncpa [#allocation4], 0
    // Predicated region
    $region2: #{tpu_custom_call.1} parent=1 // pred_check
      _
    $region3: #{tpu_custom_call.1} parent=1 // pred_check_branch
      %13 = sbr.rel (0) target = $region5
    $region4: #{tpu_custom_call.1} parent=1 // pred_region
      %s15 = ssub.s32 4096, 4096
      %16 = vsyncadd [#allocation3], %s15
      %s17 = sshll.u32 [#allocation2], 4
      %s18 = int_to_ptr.vmem [resolvable:$true] %s17
      %23 = dma.hbm_to_vmem [thread:$0]  %s0, 4096, %s18, [#allocation3], 256, 256, 16
    $region5: #{tpu_custom_call.1} parent=1 // pred_fallthru
      _
    // Predicated region
    $region6: #{tpu_custom_call.1} parent=1 // pred_check
      _
    $region7: #{tpu_custom_call.1} parent=1 // pred_check_branch
      %25 = sbr.rel (0) target = $region9
    $region8: #{tpu_custom_call.1} parent=1 // pred_region
      %s27 = ssub.s32 4096, 4096
      %28 = vsyncadd [#allocation6], %s27
      %s29 = sshll.u32 [#allocation5], 4
      %s30 = int_to_ptr.vmem [resolvable:$true] %s29
      %35 = dma.hbm_to_vmem [thread:$0]  %s1, 4096, %s30, [#allocation6], 128, 128, 8
    $region9: #{tpu_custom_call.1} parent=1 // pred_fallthru
      _
    // Predicated region
    $region10: #{tpu_custom_call.1} parent=1 // pred_check
      _
    $region11: #{tpu_custom_call.1} parent=1 // pred_check_branch
      %37 = sbr.rel (0) target = $region13
    $region12: #{tpu_custom_call.1} parent=1 // pred_region
      _
    $region13: #{tpu_custom_call.1} parent=1 // pred_fallthru
      _
    // Predicated region
    $region14: #{tpu_custom_call.1} parent=1 // pred_check
      _
    $region15: #{tpu_custom_call.1} parent=1 // pred_check_branch
      %39 = sbr.rel (0) target = $region17
    $region16: #{tpu_custom_call.1} parent=1 // pred_region
      _
    $region17: #{tpu_custom_call.1} parent=1 // pred_fallthru
      _
    // Predicated region
    $region18: #{tpu_custom_call.1} parent=1 // pred_check
      _
    $region19: #{tpu_custom_call.1} parent=1 // pred_check_branch
      %41 = sbr.rel (0) target = $region21
    $region20: #{tpu_custom_call.1} parent=1 // pred_region
      %42 = dma.done [#allocation3], 4096
    $region21: #{tpu_custom_call.1} parent=1 // pred_fallthru
      _
    // Predicated region
    $region22: #{tpu_custom_call.1} parent=1 // pred_check
      _
    $region23: #{tpu_custom_call.1} parent=1 // pred_check_branch
      %44 = sbr.rel (0) target = $region25
    $region24: #{tpu_custom_call.1} parent=1 // pred_region
      %45 = dma.done [#allocation6], 4096
    $region25: #{tpu_custom_call.1} parent=1 // pred_fallthru
      _
    %p46 = scmp.eq.s32.totalorder 0, 0
    // Predicated region
    $region26: #{tpu_custom_call.1} parent=1 // pred_check
      %p47 = pneg %p46
    $region27: #{tpu_custom_call.1} parent=1 // pred_check_branch
      %49 = sbr.rel (%p47) target = $region29
    $region28: #{tpu_custom_call.1} parent=1 // pred_region
      %50 = vst [vmem:[#allocation7] sm:$0xff] 0.0
      %51 = vst [vmem:[#allocation7 + $0x8] sm:$0xff] 0.0
      %52 = vst [vmem:[#allocation7 + $0x10] sm:$0xff] 0.0
      %53 = vst [vmem:[#allocation7 + $0x18] sm:$0xff] 0.0
      %54 = vst [vmem:[#allocation7 + $0x20] sm:$0xff] 0.0
      %55 = vst [vmem:[#allocation7 + $0x28] sm:$0xff] 0.0
      %56 = vst [vmem:[#allocation7 + $0x30] sm:$0xff] 0.0
      %57 = vst [vmem:[#allocation7 + $0x38] sm:$0xff] 0.0
      %58 = vst [vmem:[#allocation7 + $0x40] sm:$0xff] 0.0
      %59 = vst [vmem:[#allocation7 + $0x48] sm:$0xff] 0.0
      %60 = vst [vmem:[#allocation7 + $0x50] sm:$0xff] 0.0
      %61 = vst [vmem:[#allocation7 + $0x58] sm:$0xff] 0.0
      %62 = vst [vmem:[#allocation7 + $0x60] sm:$0xff] 0.0
      %63 = vst [vmem:[#allocation7 + $0x68] sm:$0xff] 0.0
      %64 = vst [vmem:[#allocation7 + $0x70] sm:$0xff] 0.0
      %65 = vst [vmem:[#allocation7 + $0x78] sm:$0xff] 0.0
    $region29: #{tpu_custom_call.1} parent=1 // pred_fallthru
      _
    %v66 = vld [vmem:[#allocation7] sm:$0xff]
    %v67 = vld [vmem:[#allocation7 + $0x8] sm:$0xff]
    %v68 = vld [vmem:[#allocation7 + $0x10] sm:$0xff]
    %v69 = vld [vmem:[#allocation7 + $0x18] sm:$0xff]
    %v70 = vld [vmem:[#allocation7 + $0x20] sm:$0xff]
    %v71 = vld [vmem:[#allocation7 + $0x28] sm:$0xff]
    %v72 = vld [vmem:[#allocation7 + $0x30] sm:$0xff]
    %v73 = vld [vmem:[#allocation7 + $0x38] sm:$0xff]
    %v74 = vld [vmem:[#allocation7 + $0x40] sm:$0xff]
    %v75 = vld [vmem:[#allocation7 + $0x48] sm:$0xff]
    %v76 = vld [vmem:[#allocation7 + $0x50] sm:$0xff]
    %v77 = vld [vmem:[#allocation7 + $0x58] sm:$0xff]
    %v78 = vld [vmem:[#allocation7 + $0x60] sm:$0xff]
    %v79 = vld [vmem:[#allocation7 + $0x68] sm:$0xff]
    %v80 = vld [vmem:[#allocation7 + $0x70] sm:$0xff]
    %v81 = vld [vmem:[#allocation7 + $0x78] sm:$0xff]
    %v82 = vld [vmem:[#allocation2] sm:$0xff]
    %v83 = vld [vmem:[#allocation2 + $0x8] sm:$0xff]
    %v84 = vld [vmem:[#allocation2 + $0x10] sm:$0xff]
    %v85 = vld [vmem:[#allocation2 + $0x18] sm:$0xff]
    %v86 = vld [vmem:[#allocation2 + $0x20] sm:$0xff]
    %v87 = vld [vmem:[#allocation2 + $0x28] sm:$0xff]
    %v88 = vld [vmem:[#allocation2 + $0x30] sm:$0xff]
    %v89 = vld [vmem:[#allocation2 + $0x38] sm:$0xff]
    %v90 = vld [vmem:[#allocation2 + $0x40] sm:$0xff]
    %v91 = vld [vmem:[#allocation2 + $0x48] sm:$0xff]
    %v92 = vld [vmem:[#allocation2 + $0x50] sm:$0xff]
    %v93 = vld [vmem:[#allocation2 + $0x58] sm:$0xff]
    %v94 = vld [vmem:[#allocation2 + $0x60] sm:$0xff]
    %v95 = vld [vmem:[#allocation2 + $0x68] sm:$0xff]
    %v96 = vld [vmem:[#allocation2 + $0x70] sm:$0xff]
    %v97 = vld [vmem:[#allocation2 + $0x78] sm:$0xff]
    %v98 = vld [vmem:[#allocation2 + $0x80] sm:$0xff]
    %v99 = vld [vmem:[#allocation2 + $0x88] sm:$0xff]
    %v100 = vld [vmem:[#allocation2 + $0x90] sm:$0xff]
    %v101 = vld [vmem:[#allocation2 + $0x98] sm:$0xff]
    %v102 = vld [vmem:[#allocation2 + $0xa0] sm:$0xff]
    %v103 = vld [vmem:[#allocation2 + $0xa8] sm:$0xff]
    %v104 = vld [vmem:[#allocation2 + $0xb0] sm:$0xff]
    %v105 = vld [vmem:[#allocation2 + $0xb8] sm:$0xff]
    %v106 = vld [vmem:[#allocation2 + $0xc0] sm:$0xff]
    %v107 = vld [vmem:[#allocation2 + $0xc8] sm:$0xff]
    %v108 = vld [vmem:[#allocation2 + $0xd0] sm:$0xff]
    %v109 = vld [vmem:[#allocation2 + $0xd8] sm:$0xff]
    %v110 = vld [vmem:[#allocation2 + $0xe0] sm:$0xff]
    %v111 = vld [vmem:[#allocation2 + $0xe8] sm:$0xff]
    %v112 = vld [vmem:[#allocation2 + $0xf0] sm:$0xff]
    %v113 = vld [vmem:[#allocation2 + $0xf8] sm:$0xff]
    %v114 = vld [vmem:[#allocation5] sm:$0xff]
    %v115 = vld [vmem:[#allocation5 + $0x8] sm:$0xff]
    %v116 = vld [vmem:[#allocation5 + $0x10] sm:$0xff]
    %v117 = vld [vmem:[#allocation5 + $0x18] sm:$0xff]
    %v118 = vld [vmem:[#allocation5 + $0x20] sm:$0xff]
    %v119 = vld [vmem:[#allocation5 + $0x28] sm:$0xff]
    %v120 = vld [vmem:[#allocation5 + $0x30] sm:$0xff]
    %v121 = vld [vmem:[#allocation5 + $0x38] sm:$0xff]
    %v122 = vld [vmem:[#allocation5 + $0x40] sm:$0xff]
    %v123 = vld [vmem:[#allocation5 + $0x48] sm:$0xff]
    %v124 = vld [vmem:[#allocation5 + $0x50] sm:$0xff]
    %v125 = vld [vmem:[#allocation5 + $0x58] sm:$0xff]
    %v126 = vld [vmem:[#allocation5 + $0x60] sm:$0xff]
    %v127 = vld [vmem:[#allocation5 + $0x68] sm:$0xff]
    %v128 = vld [vmem:[#allocation5 + $0x70] sm:$0xff]
    %v129 = vld [vmem:[#allocation5 + $0x78] sm:$0xff]
    %v130 = vld [vmem:[#allocation5 + $0x80] sm:$0xff]
    %v131 = vld [vmem:[#allocation5 + $0x88] sm:$0xff]
    %v132 = vld [vmem:[#allocation5 + $0x90] sm:$0xff]
    %v133 = vld [vmem:[#allocation5 + $0x98] sm:$0xff]
    %v134 = vld [vmem:[#allocation5 + $0xa0] sm:$0xff]
    %v135 = vld [vmem:[#allocation5 + $0xa8] sm:$0xff]
    %v136 = vld [vmem:[#allocation5 + $0xb0] sm:$0xff]
    %v137 = vld [vmem:[#allocation5 + $0xb8] sm:$0xff]
    %v138 = vld [vmem:[#allocation5 + $0xc0] sm:$0xff]
    %v139 = vld [vmem:[#allocation5 + $0xc8] sm:$0xff]
    %v140 = vld [vmem:[#allocation5 + $0xd0] sm:$0xff]
    %v141 = vld [vmem:[#allocation5 + $0xd8] sm:$0xff]
    %v142 = vld [vmem:[#allocation5 + $0xe0] sm:$0xff]
    %v143 = vld [vmem:[#allocation5 + $0xe8] sm:$0xff]
    %v144 = vld [vmem:[#allocation5 + $0xf0] sm:$0xff]
    %v145 = vld [vmem:[#allocation5 + $0xf8] sm:$0xff]
    %146 = vmatprep.subr.mxu0 0.0
    %147 = vmatpush1.msra.mxu0 %v114
    %148 = vmatprep.subr.mxu0 0.0
    %149 = vmatpush1.msra.mxu0 %v115
    %150 = vmatprep.subr.mxu0 0.0
    %151 = vmatpush1.msra.mxu0 %v116
    %152 = vmatprep.subr.mxu0 0.0
    %153 = vmatpush1.msra.mxu0 %v117
    %154 = vmatprep.subr.mxu0 0.0
    %155 = vmatpush1.msra.mxu0 %v118
    %156 = vmatprep.subr.mxu0 0.0
    %157 = vmatpush1.msra.mxu0 %v119
    %158 = vmatprep.subr.mxu0 0.0
    %159 = vmatpush1.msra.mxu0 %v120
    %160 = vmatprep.subr.mxu0 0.0
    %161 = vmatpush1.msra.mxu0 %v121
    %162 = vmatprep.subr.mxu0 0.0
    %163 = vmatpush1.msra.mxu0 %v122
    %164 = vmatprep.subr.mxu0 0.0
    %165 = vmatpush1.msra.mxu0 %v123
    %166 = vmatprep.subr.mxu0 0.0
    %167 = vmatpush1.msra.mxu0 %v124
    %168 = vmatprep.subr.mxu0 0.0
    %169 = vmatpush1.msra.mxu0 %v125
    %170 = vmatprep.subr.mxu0 0.0
    %171 = vmatpush1.msra.mxu0 %v126
    %172 = vmatprep.subr.mxu0 0.0
    %173 = vmatpush1.msra.mxu0 %v127
    %174 = vmatprep.subr.mxu0 0.0
    %175 = vmatpush1.msra.mxu0 %v128
    %176 = vmatprep.subr.mxu0 0.0
    %177 = vmatpush1.msra.mxu0 %v129
    %178 = vmatprep.subr.mxu0 0.0
    %179 = vmatpush1.msra.mxu0 %v130
    %180 = vmatprep.subr.mxu0 0.0
    %181 = vmatpush1.msra.mxu0 %v131
    %182 = vmatprep.subr.mxu0 0.0
    %183 = vmatpush1.msra.mxu0 %v132
    %184 = vmatprep.subr.mxu0 0.0
    %185 = vmatpush1.msra.mxu0 %v133
    %186 = vmatprep.subr.mxu0 0.0
    %187 = vmatpush1.msra.mxu0 %v134
    %188 = vmatprep.subr.mxu0 0.0
    %189 = vmatpush1.msra.mxu0 %v135
    %190 = vmatprep.subr.mxu0 0.0
    %191 = vmatpush1.msra.mxu0 %v136
    %192 = vmatprep.subr.mxu0 0.0
    %193 = vmatpush1.msra.mxu0 %v137
    %194 = vmatprep.subr.mxu0 0.0
    %195 = vmatpush1.msra.mxu0 %v138
    %196 = vmatprep.subr.mxu0 0.0
    %197 = vmatpush1.msra.mxu0 %v139
    %198 = vmatprep.subr.mxu0 0.0
    %199 = vmatpush1.msra.mxu0 %v140
    %200 = vmatprep.subr.mxu0 0.0
    %201 = vmatpush1.msra.mxu0 %v141
    %202 = vmatprep.subr.mxu0 0.0
    %203 = vmatpush1.msra.mxu0 %v142
    %204 = vmatprep.subr.mxu0 0.0
    %205 = vmatpush1.msra.mxu0 %v143
    %206 = vmatprep.subr.mxu0 0.0
    %207 = vmatpush1.msra.mxu0 %v144
    %208 = vmatprep.subr.mxu0 0.0
    %209 = vmatpush1.msra.mxu0 %v145
    %210 = vmatprep.mubr.f32.mxu0 %v83
    %211 = vmatmul.mubr.f32.gmra.mrb[0].mxu0 %v82
    %v212 = vpop.f32.mrb[0].mxu0
    %v213 = vadd.f32 0.0, %v212
    %v214 = vpop.f32.mrb[0].mxu0
    %215 = vmatprep.mubr.f32.mxu0 %v85
    %216 = vmatmul.mubr.f32.gmra.mrb[0].mxu0 %v84
    %v217 = vpop.f32.mrb[0].mxu0
    %v218 = vadd.f32 0.0, %v217
    %v219 = vpop.f32.mrb[0].mxu0
    %220 = vmatprep.mubr.f32.mxu0 %v87
    %221 = vmatmul.mubr.f32.gmra.mrb[0].mxu0 %v86
    %v222 = vpop.f32.mrb[0].mxu0
    %v223 = vadd.f32 0.0, %v222
    %v224 = vpop.f32.mrb[0].mxu0
    %225 = vmatprep.mubr.f32.mxu0 %v89
    %226 = vmatmul.mubr.f32.gmra.mrb[0].mxu0 %v88
    %v227 = vpop.f32.mrb[0].mxu0
    %v228 = vadd.f32 0.0, %v227
    %v229 = vpop.f32.mrb[0].mxu0
    %230 = vmatprep.mubr.f32.mxu0 %v91
    %231 = vmatmul.mubr.f32.gmra.mrb[0].mxu0 %v90
    %v232 = vpop.f32.mrb[0].mxu0
    %v233 = vadd.f32 0.0, %v232
    %v234 = vpop.f32.mrb[0].mxu0
    %235 = vmatprep.mubr.f32.mxu0 %v93
    %236 = vmatmul.mubr.f32.gmra.mrb[0].mxu0 %v92
    %v237 = vpop.f32.mrb[0].mxu0
    %v238 = vadd.f32 0.0, %v237
    %v239 = vpop.f32.mrb[0].mxu0
    %240 = vmatprep.mubr.f32.mxu0 %v95
    %241 = vmatmul.mubr.f32.gmra.mrb[0].mxu0 %v94
    %v242 = vpop.f32.mrb[0].mxu0
    %v243 = vadd.f32 0.0, %v242
    %v244 = vpop.f32.mrb[0].mxu0
    %245 = vmatprep.mubr.f32.mxu0 %v97
    %246 = vmatmul.mubr.f32.gmra.mrb[0].mxu0 %v96
    %v247 = vpop.f32.mrb[0].mxu0
    %v248 = vadd.f32 0.0, %v247
    %v249 = vpop.f32.mrb[0].mxu0
    %250 = vmatprep.mubr.f32.mxu0 %v99
    %251 = vmatmul.mubr.f32.gmra.mrb[0].mxu0 %v98
    %v252 = vpop.f32.mrb[0].mxu0
    %v253 = vadd.f32 0.0, %v252
    %v254 = vpop.f32.mrb[0].mxu0
    %255 = vmatprep.mubr.f32.mxu0 %v101
    %256 = vmatmul.mubr.f32.gmra.mrb[0].mxu0 %v100
    %v257 = vpop.f32.mrb[0].mxu0
    %v258 = vadd.f32 0.0, %v257
    %v259 = vpop.f32.mrb[0].mxu0
    %260 = vmatprep.mubr.f32.mxu0 %v103
    %261 = vmatmul.mubr.f32.gmra.mrb[0].mxu0 %v102
    %v262 = vpop.f32.mrb[0].mxu0
    %v263 = vadd.f32 0.0, %v262
    %v264 = vpop.f32.mrb[0].mxu0
    %265 = vmatprep.mubr.f32.mxu0 %v105
    %266 = vmatmul.mubr.f32.gmra.mrb[0].mxu0 %v104
    %v267 = vpop.f32.mrb[0].mxu0
    %v268 = vadd.f32 0.0, %v267
    %v269 = vpop.f32.mrb[0].mxu0
    %270 = vmatprep.mubr.f32.mxu0 %v107
    %271 = vmatmul.mubr.f32.gmra.mrb[0].mxu0 %v106
    %v272 = vpop.f32.mrb[0].mxu0
    %v273 = vadd.f32 0.0, %v272
    %v274 = vpop.f32.mrb[0].mxu0
    %275 = vmatprep.mubr.f32.mxu0 %v109
    %276 = vmatmul.mubr.f32.gmra.mrb[0].mxu0 %v108
    %v277 = vpop.f32.mrb[0].mxu0
    %v278 = vadd.f32 0.0, %v277
    %v279 = vpop.f32.mrb[0].mxu0
    %280 = vmatprep.mubr.f32.mxu0 %v111
    %281 = vmatmul.mubr.f32.gmra.mrb[0].mxu0 %v110
    %v282 = vpop.f32.mrb[0].mxu0
    %v283 = vadd.f32 0.0, %v282
    %v284 = vpop.f32.mrb[0].mxu0
    %285 = vmatprep.mubr.f32.mxu0 %v113
    %286 = vmatmul.mubr.f32.gmra.mrb[0].mxu0 %v112
    %v287 = vpop.f32.mrb[0].mxu0
    %v288 = vadd.f32 0.0, %v287
    %v289 = vpop.f32.mrb[0].mxu0
    %290 = vdwg.mxu0
    %v291 = vadd.f32 %v66, %v213
    %v292 = vadd.f32 %v67, %v218
    %v293 = vadd.f32 %v68, %v223
    %v294 = vadd.f32 %v69, %v228
    %v295 = vadd.f32 %v70, %v233
    %v296 = vadd.f32 %v71, %v238
    %v297 = vadd.f32 %v72, %v243
    %v298 = vadd.f32 %v73, %v248
    %v299 = vadd.f32 %v74, %v253
    %v300 = vadd.f32 %v75, %v258
    %v301 = vadd.f32 %v76, %v263
    %v302 = vadd.f32 %v77, %v268
    %v303 = vadd.f32 %v78, %v273
    %v304 = vadd.f32 %v79, %v278
    %v305 = vadd.f32 %v80, %v283
    %v306 = vadd.f32 %v81, %v288
    %307 = vst [vmem:[#allocation7] sm:$0xff] %v291
    %308 = vst [vmem:[#allocation7 + $0x8] sm:$0xff] %v292
    %309 = vst [vmem:[#allocation7 + $0x10] sm:$0xff] %v293
    %310 = vst [vmem:[#allocation7 + $0x18] sm:$0xff] %v294
    %311 = vst [vmem:[#allocation7 + $0x20] sm:$0xff] %v295
    %312 = vst [vmem:[#allocation7 + $0x28] sm:$0xff] %v296
    %313 = vst [vmem:[#allocation7 + $0x30] sm:$0xff] %v297
    %314 = vst [vmem:[#allocation7 + $0x38] sm:$0xff] %v298
    %315 = vst [vmem:[#allocation7 + $0x40] sm:$0xff] %v299
    %316 = vst [vmem:[#allocation7 + $0x48] sm:$0xff] %v300
    %317 = vst [vmem:[#allocation7 + $0x50] sm:$0xff] %v301
    %318 = vst [vmem:[#allocation7 + $0x58] sm:$0xff] %v302
    %319 = vst [vmem:[#allocation7 + $0x60] sm:$0xff] %v303
    %320 = vst [vmem:[#allocation7 + $0x68] sm:$0xff] %v304
    %321 = vst [vmem:[#allocation7 + $0x70] sm:$0xff] %v305
    %322 = vst [vmem:[#allocation7 + $0x78] sm:$0xff] %v306
    // Predicated region
    $region30: #{tpu_custom_call.1} parent=1 // pred_check
      %p323 = pneg %p46
    $region31: #{tpu_custom_call.1} parent=1 // pred_check_branch
      %325 = sbr.rel (%p323) target = $region33
    $region32: #{tpu_custom_call.1} parent=1 // pred_region
      %v326 = vld [vmem:[#allocation7] sm:$0xff]
      %v327 = vld [vmem:[#allocation7 + $0x8] sm:$0xff]
      %v328 = vld [vmem:[#allocation7 + $0x10] sm:$0xff]
      %v329 = vld [vmem:[#allocation7 + $0x18] sm:$0xff]
      %v330 = vld [vmem:[#allocation7 + $0x20] sm:$0xff]
      %v331 = vld [vmem:[#allocation7 + $0x28] sm:$0xff]
      %v332 = vld [vmem:[#allocation7 + $0x30] sm:$0xff]
      %v333 = vld [vmem:[#allocation7 + $0x38] sm:$0xff]
      %v334 = vld [vmem:[#allocation7 + $0x40] sm:$0xff]
      %v335 = vld [vmem:[#allocation7 + $0x48] sm:$0xff]
      %v336 = vld [vmem:[#allocation7 + $0x50] sm:$0xff]
      %v337 = vld [vmem:[#allocation7 + $0x58] sm:$0xff]
      %v338 = vld [vmem:[#allocation7 + $0x60] sm:$0xff]
      %v339 = vld [vmem:[#allocation7 + $0x68] sm:$0xff]
      %v340 = vld [vmem:[#allocation7 + $0x70] sm:$0xff]
      %v341 = vld [vmem:[#allocation7 + $0x78] sm:$0xff]
      %v342 = vadd.f32 %v326, %v327
      %v343 = vadd.f32 %v342, %v328
      %v344 = vadd.f32 %v343, %v329
      %v345 = vadd.f32 %v344, %v330
      %v346 = vadd.f32 %v345, %v331
      %v347 = vadd.f32 %v346, %v332
      %v348 = vadd.f32 %v347, %v333
      %v349 = vadd.f32 %v348, %v334
      %v350 = vadd.f32 %v349, %v335
      %v351 = vadd.f32 %v350, %v336
      %v352 = vadd.f32 %v351, %v337
      %v353 = vadd.f32 %v352, %v338
      %v354 = vadd.f32 %v353, %v339
      %v355 = vadd.f32 %v354, %v340
      %v356 = vadd.f32 %v355, %v341
      %v357 = vrot.slane %v356, 4
      %v358 = vadd.f32 %v356, %v357
      %v359 = vrot.slane %v358, 2
      %v360 = vadd.f32 %v358, %v359
      %v361 = vrot.slane %v360, 1
      %v362 = vadd.f32 %v360, %v361
      %v363 = vmul.f32 %v362, 0.0078125
      %v364 = vsub.f32 %v326, %v363
      %v365 = vsub.f32 %v327, %v363
      %v366 = vsub.f32 %v328, %v363
      %v367 = vsub.f32 %v329, %v363
      %v368 = vsub.f32 %v330, %v363
      %v369 = vsub.f32 %v331, %v363
      %v370 = vsub.f32 %v332, %v363
      %v371 = vsub.f32 %v333, %v363
      %v372 = vsub.f32 %v334, %v363
      %v373 = vsub.f32 %v335, %v363
      %v374 = vsub.f32 %v336, %v363
      %v375 = vsub.f32 %v337, %v363
      %v376 = vsub.f32 %v338, %v363
      %v377 = vsub.f32 %v339, %v363
      %v378 = vsub.f32 %v340, %v363
      %v379 = vsub.f32 %v341, %v363
      %v380 = vmul.f32 %v364, %v364
      %v381 = vmul.f32 %v365, %v365
      %v382 = vmul.f32 %v366, %v366
      %v383 = vmul.f32 %v367, %v367
      %v384 = vmul.f32 %v368, %v368
      %v385 = vmul.f32 %v369, %v369
      %v386 = vmul.f32 %v370, %v370
      %v387 = vmul.f32 %v371, %v371
      %v388 = vmul.f32 %v372, %v372
      %v389 = vmul.f32 %v373, %v373
      %v390 = vmul.f32 %v374, %v374
      %v391 = vmul.f32 %v375, %v375
      %v392 = vmul.f32 %v376, %v376
      %v393 = vmul.f32 %v377, %v377
      %v394 = vmul.f32 %v378, %v378
      %v395 = vmul.f32 %v379, %v379
      %v396 = vadd.f32 %v380, %v381
      %v397 = vadd.f32 %v396, %v382
      %v398 = vadd.f32 %v397, %v383
      %v399 = vadd.f32 %v398, %v384
      %v400 = vadd.f32 %v399, %v385
      %v401 = vadd.f32 %v400, %v386
      %v402 = vadd.f32 %v401, %v387
      %v403 = vadd.f32 %v402, %v388
      %v404 = vadd.f32 %v403, %v389
      %v405 = vadd.f32 %v404, %v390
      %v406 = vadd.f32 %v405, %v391
      %v407 = vadd.f32 %v406, %v392
      %v408 = vadd.f32 %v407, %v393
      %v409 = vadd.f32 %v408, %v394
      %v410 = vadd.f32 %v409, %v395
      %v411 = vrot.slane %v410, 4
      %v412 = vadd.f32 %v410, %v411
      %v413 = vrot.slane %v412, 2
      %v414 = vadd.f32 %v412, %v413
      %v415 = vrot.slane %v414, 1
      %v416 = vadd.f32 %v414, %v415
      %v417 = vmul.f32 %v416, 0.0078125
      %v418 = vld [vmem:[%s2] sm:$0x1]
      %v419 = vadd.f32 %v417, 1e-05
      %v420 = vrsqrt.pop %v419
      %v421 = vmul.f32 %v418, %v420
      %v423 = vlaneseq
      %v424 = vshrl.u32 %v423, 7
      %v425 = vsub.s32 0, %v424
      %v426 = vrot.slane %v421, %v425
      %v428 = vmul.f32 %v364, %v426
      %v429 = vmul.f32 %v365, %v426
      %v430 = vmul.f32 %v366, %v426
      %v431 = vmul.f32 %v367, %v426
      %v432 = vmul.f32 %v368, %v426
      %v433 = vmul.f32 %v369, %v426
      %v434 = vmul.f32 %v370, %v426
      %v435 = vmul.f32 %v371, %v426
      %v436 = vmul.f32 %v372, %v426
      %v437 = vmul.f32 %v373, %v426
      %v438 = vmul.f32 %v374, %v426
      %v439 = vmul.f32 %v375, %v426
      %v440 = vmul.f32 %v376, %v426
      %v441 = vmul.f32 %v377, %v426
      %v442 = vmul.f32 %v378, %v426
      %v443 = vmul.f32 %v379, %v426
      %v444 = vld [vmem:[%s3] sm:$0x1]
      %v446 = vlaneseq
      %v447 = vshrl.u32 %v446, 7
      %v448 = vsub.s32 0, %v447
      %v449 = vrot.slane %v444, %v448
      %v451 = vadd.f32 %v428, %v449
      %v452 = vadd.f32 %v429, %v449
      %v453 = vadd.f32 %v430, %v449
      %v454 = vadd.f32 %v431, %v449
      %v455 = vadd.f32 %v432, %v449
      %v456 = vadd.f32 %v433, %v449
      %v457 = vadd.f32 %v434, %v449
      %v458 = vadd.f32 %v435, %v449
      %v459 = vadd.f32 %v436, %v449
      %v460 = vadd.f32 %v437, %v449
      %v461 = vadd.f32 %v438, %v449
      %v462 = vadd.f32 %v439, %v449
      %v463 = vadd.f32 %v440, %v449
      %v464 = vadd.f32 %v441, %v449
      %v465 = vadd.f32 %v442, %v449
      %v466 = vadd.f32 %v443, %v449
      %v467 = vmax.f32 %v451, 0.0
      %v468 = vmax.f32 %v452, 0.0
      %v469 = vmax.f32 %v453, 0.0
      %v470 = vmax.f32 %v454, 0.0
      %v471 = vmax.f32 %v455, 0.0
      %v472 = vmax.f32 %v456, 0.0
      %v473 = vmax.f32 %v457, 0.0
      %v474 = vmax.f32 %v458, 0.0
      %v475 = vmax.f32 %v459, 0.0
      %v476 = vmax.f32 %v460, 0.0
      %v477 = vmax.f32 %v461, 0.0
      %v478 = vmax.f32 %v462, 0.0
      %v479 = vmax.f32 %v463, 0.0
      %v480 = vmax.f32 %v464, 0.0
      %v481 = vmax.f32 %v465, 0.0
      %v482 = vmax.f32 %v466, 0.0
      %483 = vst [vmem:[#allocation7] sm:$0xff] %v467
      %484 = vst [vmem:[#allocation7 + $0x8] sm:$0xff] %v468
      %485 = vst [vmem:[#allocation7 + $0x10] sm:$0xff] %v469
      %486 = vst [vmem:[#allocation7 + $0x18] sm:$0xff] %v470
      %487 = vst [vmem:[#allocation7 + $0x20] sm:$0xff] %v471
      %488 = vst [vmem:[#allocation7 + $0x28] sm:$0xff] %v472
      %489 = vst [vmem:[#allocation7 + $0x30] sm:$0xff] %v473
      %490 = vst [vmem:[#allocation7 + $0x38] sm:$0xff] %v474
      %491 = vst [vmem:[#allocation7 + $0x40] sm:$0xff] %v475
      %492 = vst [vmem:[#allocation7 + $0x48] sm:$0xff] %v476
      %493 = vst [vmem:[#allocation7 + $0x50] sm:$0xff] %v477
      %494 = vst [vmem:[#allocation7 + $0x58] sm:$0xff] %v478
      %495 = vst [vmem:[#allocation7 + $0x60] sm:$0xff] %v479
      %496 = vst [vmem:[#allocation7 + $0x68] sm:$0xff] %v480
      %497 = vst [vmem:[#allocation7 + $0x70] sm:$0xff] %v481
      %498 = vst [vmem:[#allocation7 + $0x78] sm:$0xff] %v482
    $region33: #{tpu_custom_call.1} parent=1 // pred_fallthru
      _
    // Predicated region
    $region34: #{tpu_custom_call.1} parent=1 // pred_check
      _
    $region35: #{tpu_custom_call.1} parent=1 // pred_check_branch
      %500 = sbr.rel (0) target = $region37
    $region36: #{tpu_custom_call.1} parent=1 // pred_region
      %s502 = ssub.s32 2048, 2048
      %503 = vsyncadd [#allocation4], %s502
      %s504 = sshll.u32 [#allocation7], 4
      %s505 = int_to_ptr.vmem [resolvable:$true] %s504
      %510 = dma.vmem_to_hbm [thread:$0]  %s505, 2048, %s4, [#allocation4], 128, 128, 8
    $region37: #{tpu_custom_call.1} parent=1 // pred_fallthru
      _
    // Predicated region
    $region38: #{tpu_custom_call.1} parent=1 // pred_check
      _
    $region39: #{tpu_custom_call.1} parent=1 // pred_check_branch
      %512 = sbr.rel (0) target = $region41
    $region40: #{tpu_custom_call.1} parent=1 // pred_region
      %513 = dma.done [#allocation4], 2048
    $region41: #{tpu_custom_call.1} parent=1 // pred_fallthru
      _
    %514 = vsyncpa [#allocation3], 1
    %515 = vsyncpa [#allocation6], 1
    %516 = vsyncpa [#allocation4], 1

</llo_original>
